<compile_context>
chip_gen: v6e
topology: v6e:2x2x1
jax: 0.10.0
libtpu: 0.0.40
codegen_flags: <defaults>
</compile_context>

<pallas_src>
import functools
import math

import jax
import jax.numpy as jnp
from jax.experimental import pallas as pl
from jax.experimental.pallas import tpu as pltpu


def _round_up(x, m):
    return ((x + m - 1) // m) * m


def _round_down(x, m):
    return max(m, (x // m) * m)


def _vmem_caps():
    """Returns (physical per-core VMEM bytes, usable cap with headroom)."""
    phys = 64 << 20
    try:
        info = pltpu.get_tpu_info()
        phys = int(getattr(info, "vmem_capacity_bytes", phys)) or phys
    except Exception:
        pass
    # Leave headroom for Mosaic internal scratch / semaphores / double buffers:
    # ~54 MiB on v7x (64 MiB physical), ~108 MiB on v5e/v6e (128 MiB physical).
    cap = min(int(phys * 0.85), phys - (8 << 20))
    return phys, max(cap, 16 << 20)


# ---------------------------------------------------------------------------
# Kernels
# ---------------------------------------------------------------------------

def _spfc_resident_kernel(f_ref, w_ref, b_ref, o_ref, *, compute_dtype):
    """Weight/bias grid-resident; one MXU dot per streamed feature row tile."""
    f = f_ref[...]
    if compute_dtype is not None and f.dtype != compute_dtype:
        f = f.astype(compute_dtype)          # weight already cast in wrapper
    acc = jnp.dot(f, w_ref[...], preferred_element_type=jnp.float32)
    o_ref[...] = (acc + b_ref[...]).astype(o_ref.dtype)


def _spfc_ktiled_f32out_kernel(mask_ref, f_ref, w_ref, b_ref, o_ref, *,
                               compute_dtype, nk):
    """K-tiled reduction accumulating into the resident f32 output tile.

    mask_ref: scalar-prefetched flat (ni*nk,) int32 block-nonzero table; zero
    entries skip the MXU dot for all-zero feature blocks.
    """
    i = pl.program_id(0)
    k = pl.program_id(2)

    @pl.when(k == 0)
    def _():
        o_ref[...] = jnp.broadcast_to(b_ref[...], o_ref.shape).astype(o_ref.dtype)

    @pl.when(mask_ref[i * nk + k] != 0)
    def _():
        f = f_ref[...]
        if compute_dtype is not None and f.dtype != compute_dtype:
            f = f.astype(compute_dtype)
        o_ref[...] += jnp.dot(f, w_ref[...], preferred_element_type=jnp.float32)


def _spfc_ktiled_acc_kernel(mask_ref, f_ref, w_ref, b_ref, o_ref, acc_ref, *,
                            compute_dtype, nk):
    """K-tiled reduction with f32 VMEM accumulator (for non-f32 outputs)."""
    i = pl.program_id(0)
    k = pl.program_id(2)

    @pl.when(k == 0)
    def _():
        acc_ref[...] = jnp.zeros_like(acc_ref)

    @pl.when(mask_ref[i * nk + k] != 0)
    def _():
        f = f_ref[...]
        if compute_dtype is not None and f.dtype != compute_dtype:
            f = f.astype(compute_dtype)
        acc_ref[...] += jnp.dot(f, w_ref[...], preferred_element_type=jnp.float32)

    @pl.when(k == pl.num_programs(2) - 1)
    def _():
        o_ref[...] = (acc_ref[...] + b_ref[...]).astype(o_ref.dtype)


# ---------------------------------------------------------------------------
# Wrapper
# ---------------------------------------------------------------------------

def sparse_fully_connected(feature, weight, bias, *,
                           tm=512, tn=512, tk=512,
                           compute_dtype=jnp.bfloat16,
                           k_resident=None,
                           block_sparse=False,
                           block_mask=None,
                           out_dtype=None):
    """filtered = feature @ weight + bias as a Pallas TPU kernel.

    feature: [N, C_in], weight: [C_in, C_out], bias: [C_out] -> [N, C_out]
    compute_dtype: dtype fed to the MXU (default bf16; f32 accumulation). Use
      None for full-precision operands; on v7x an fp8 dtype also works here.
    k_resident: force (True) / forbid (False) the weight-resident 1-D-grid
      path; None = auto based on a generation-aware VMEM budget.
    block_sparse: use the K-tiled path with a per-(row-tile, k-tile) nonzero
      mask (scalar prefetch) so all-zero feature blocks skip the MXU.
    block_mask: optional precomputed (ni, nk) / flat int32 mask (amortize the
      mask pass when the feature is reused across APPNP iterations).
    """
    N, K = feature.shape
    K2, C_out = weight.shape
    assert K == K2 and bias.shape == (C_out,)
    out_dtype = jnp.dtype(feature.dtype if out_dtype is None else out_dtype)

    # Cast the (small) weight once here so the MXU sees its native bf16/fp8 and
    # the resident panel / DMA bytes shrink; feature tiles are cast in-kernel.
    w = weight
    if compute_dtype is not None and w.dtype != compute_dtype:
        w = w.astype(compute_dtype)
    b2d = bias.astype(jnp.float32).reshape(1, C_out)   # epilogue stays f32

    bf = jnp.dtype(feature.dtype).itemsize
    bw = jnp.dtype(w.dtype).itemsize
    bo = out_dtype.itemsize

    _, vmem_cap = _vmem_caps()
    budget = int(0.9 * vmem_cap)

    # Row tile: multiple of 8, never larger than the (rounded-up) row count.
    tm = _round_down(min(tm, _round_up(N, 8)), 8)

    def resident_est(tm_):
        return (2 * tm_ * K * bf          # feature tile, double buffered
                + 2 * K * C_out * bw      # weight panel (worst case 2 buffers)
                + 2 * C_out * 4           # bias row
                + 2 * tm_ * C_out * bo)   # output tile

    resident = k_resident
    if resident is None:
        resident = resident_est(8) <= budget
    if block_sparse:
        resident = False                  # block-skip lives on the K-tiled path

    if resident:
        while tm > 8 and resident_est(tm) > budget:
            tm = _round_down(tm // 2, 8)
        est = resident_est(tm)
        kernel = functools.partial(_spfc_resident_kernel,
                                   compute_dtype=compute_dtype)
        grid_spec = pltpu.PrefetchScalarGridSpec(
            num_scalar_prefetch=0,
            grid=(pl.cdiv(N, tm),),
            in_specs=[
                pl.BlockSpec((tm, K), lambda i: (i, 0)),      # stream rows
                pl.BlockSpec((K, C_out), lambda i: (0, 0)),   # resident weight
                pl.BlockSpec((1, C_out), lambda i: (0, 0)),   # resident bias
            ],
            out_specs=pl.BlockSpec((tm, C_out), lambda i: (i, 0)),
        )
        dims = ("parallel",)              # shards across v7x's 2 TensorCores
        args = (feature, w, b2d)
    else:
        tn = _round_down(min(tn, _round_up(C_out, 128)), 128)
        tk = _round_down(min(tk, _round_up(K, 128)), 128)
        use_acc = out_dtype != jnp.dtype(jnp.float32)

        def ktiled_est(tm_, tn_, tk_):
            e = 2 * (tm_ * tk_ * bf + tk_ * tn_ * bw + tn_ * 4 + tm_ * tn_ * bo)
            if use_acc:
                e += tm_ * tn_ * 4
            return e

        while ktiled_est(tm, tn, tk) > budget and tk > 128:
            tk = _round_down(tk // 2, 128)
        while ktiled_est(tm, tn, tk) > budget and tm > 8:
            tm = _round_down(tm // 2, 8)
        est = ktiled_est(tm, tn, tk)

        K_pad = _round_up(K, tk)
        nk = K_pad // tk
        ni = pl.cdiv(N, tm)

        f = feature
        if K_pad != K:
            # Only the (small) K axis is ever padded; N / C_out raggedness is
            # handled by the cdiv grid (OOB rows/cols are dropped on store).
            f = jnp.pad(f, ((0, 0), (0, K_pad - K)))

        if block_mask is not None:
            mask = block_mask.astype(jnp.int32).reshape(-1)
        elif block_sparse:
            nz = (f != 0)
            nz_k = jnp.any(nz.reshape(N, nk, tk), axis=2)          # (N, nk)
            pad_rows = ni * tm - N
            if pad_rows:
                nz_k = jnp.pad(nz_k, ((0, pad_rows), (0, 0)))
            mask = jnp.any(nz_k.reshape(ni, tm, nk), axis=1)       # (ni, nk)
            mask = mask.astype(jnp.int32).reshape(-1)
        else:
            mask = jnp.ones((ni * nk,), jnp.int32)

        if use_acc:
            kernel = functools.partial(_spfc_ktiled_acc_kernel,
                                       compute_dtype=compute_dtype, nk=nk)
            scratch = [pltpu.VMEM((tm, tn), jnp.float32)]
        else:
            kernel = functools.partial(_spfc_ktiled_f32out_kernel,
                                       compute_dtype=compute_dtype, nk=nk)
            scratch = []

        grid_spec = pltpu.PrefetchScalarGridSpec(
            num_scalar_prefetch=1,
            grid=(ni, pl.cdiv(C_out, tn), nk),
            in_specs=[
                pl.BlockSpec((tm, tk), lambda i, j, k, m: (i, k)),
                pl.BlockSpec((tk, tn), lambda i, j, k, m: (k, j)),
                pl.BlockSpec((1, tn), lambda i, j, k, m: (0, j)),
            ],
            out_specs=pl.BlockSpec((tm, tn), lambda i, j, k, m: (i, j)),
            scratch_shapes=scratch,
        )
        dims = ("parallel", "parallel", "arbitrary")
        args = (mask, f, w, b2d)

    vmem_limit = min(max(int(est * 1.25) + (4 << 20), 32 << 20), vmem_cap)

    return pl.pallas_call(
        kernel,
        out_shape=jax.ShapeDtypeStruct((N, C_out), out_dtype),
        grid_spec=grid_spec,
        compiler_params=pltpu.CompilerParams(
            dimension_semantics=dims,
            vmem_limit_bytes=vmem_limit,
        ),
    )(*args)


# ---------------------------------------------------------------------------
# Parameter init matching the PyTorch module
# ---------------------------------------------------------------------------

def init_params(key, in_channels, out_channels, dtype=jnp.float32):
    """weight: xavier_uniform_ -> U(-a, a), a = sqrt(6/(fan_in+fan_out));
       bias:   uniform(out)    -> U(-1/sqrt(out), 1/sqrt(out))."""
    kw, kb = jax.random.split(key)
    a = math.sqrt(6.0 / (in_channels + out_channels))
    weight = jax.random.uniform(kw, (in_channels, out_channels), dtype,
                                minval=-a, maxval=a)
    stdv = 1.0 / math.sqrt(out_channels)
    bias = jax.random.uniform(kb, (out_channels,), dtype,
                              minval=-stdv, maxval=stdv)
    return weight, bias


if __name__ == "__main__":
    # Small GNN-like problem: 256 nodes, 192 in-features, 320 out-features
    # (K not a multiple of 128, C_out not a multiple of tn: exercises the
    # no-padding full-dim block path).
    N, C_in, C_out = 256, 192, 320
    key = jax.random.PRNGKey(0)
    k_feat, k_mask, k_params = jax.random.split(key, 3)

    # "Sparse" feature matrix: dense storage, ~90% zeros (spmm semantics are
    # identical to a dense matmul).
    dense = jax.random.normal(k_feat, (N, C_in), jnp.float32)
    keep = jax.random.uniform(k_mask, (N, C_in)) < 0.1
    feature = jnp.where(keep, dense, 0.0)

    weight, bias = init_params(k_params, C_in, C_out)
    ref = jnp.dot(feature, weight,
                  precision=jax.lax.Precision.HIGHEST) + bias[None, :]

    # 1) default: weight-resident 1-D grid, bf16 MXU operands, f32 accumulation.
    out = jax.block_until_ready(sparse_fully_connected(feature, weight, bias))
    assert out.shape == (N, C_out)
    assert jnp.allclose(out, ref, atol=3e-2, rtol=3e-2)

    # 2) full-f32 operands on the same resident path (tight tolerance).
    out_f32 = jax.block_until_ready(
        sparse_fully_connected(feature, weight, bias, compute_dtype=None))
    assert jnp.allclose(out_f32, ref, atol=2e-3, rtol=2e-3)

    # 3) K-tiled path with block-sparse MXU skipping: zero out the upper K
    #    columns so one whole K-block is skipped via the prefetched mask.
    feature_bs = feature.at[:, 128:].set(0.0)
    ref_bs = jnp.dot(feature_bs, weight,
                     precision=jax.lax.Precision.HIGHEST) + bias[None, :]
    out_bs = jax.block_until_ready(
        sparse_fully_connected(feature_bs, weight, bias, tk=128,
                               block_sparse=True))
    assert jnp.allclose(out_bs, ref_bs, atol=3e-2, rtol=3e-2)

    # 4) ragged row count: no N padding / no output slice, cdiv grid handles it.
    out_rag = jax.block_until_ready(
        sparse_fully_connected(feature[:250], weight, bias, compute_dtype=None))
    assert out_rag.shape == (250, C_out)
    assert jnp.allclose(out_rag, ref[:250], atol=2e-3, rtol=2e-3)

    print("KERNEL_OK")
</pallas_src>

<mosaic_0001>
module attributes {stable_mosaic.version = 11 : i64} {
  func.func @_spfc_resident_kernel(%arg0: i32, %arg1: memref<256x192xf32, #tpu.memory_space<vmem>>, %arg2: memref<192x320xbf16, #tpu.memory_space<vmem>>, %arg3: memref<1x320xf32, #tpu.memory_space<vmem>>, %arg4: memref<256x320xf32, #tpu.memory_space<vmem>>) attributes {dimension_semantics = [#tpu.dimension_semantics<parallel>], iteration_bounds = array<i64: 1>, scalar_prefetch = 0 : i64, scratch_operands = 0 : i64, tpu.core_type = #tpu.core_type<tc>, window_params = [{transform_indices = @transform_0, window_bounds = array<i64: 256, 192>}, {pipeline_mode = #tpu.pipeline_mode<synchronous>, transform_indices = @transform_1, window_bounds = array<i64: 192, 320>}, {pipeline_mode = #tpu.pipeline_mode<synchronous>, transform_indices = @transform_2, window_bounds = array<i64: 1, 320>}, {transform_indices = @transform_3, window_bounds = array<i64: 256, 320>}]} {
    %c0 = arith.constant 0 : index
    %c0_0 = arith.constant 0 : index
    %0 = vector.load %arg1[%c0, %c0_0] : memref<256x192xf32, #tpu.memory_space<vmem>>, vector<256x192xf32>
    %1 = arith.truncf %0 : vector<256x192xf32> to vector<256x192xbf16>
    %c0_1 = arith.constant 0 : index
    %c0_2 = arith.constant 0 : index
    %2 = vector.load %arg2[%c0_1, %c0_2] : memref<192x320xbf16, #tpu.memory_space<vmem>>, vector<192x320xbf16>
    %cst = arith.constant dense<0.000000e+00> : vector<256x320xf32>
    %3 = tpu.matmul %1, %2, %cst {dimension_numbers = #tpu.dot_dimension_numbers<[1], [0], [0], [1], [0, 0, 1, 1], [], []>} : vector<256x192xbf16>, vector<192x320xbf16>, vector<256x320xf32> -> vector<256x320xf32>
    %c0_3 = arith.constant 0 : index
    %c0_4 = arith.constant 0 : index
    %4 = vector.load %arg3[%c0_3, %c0_4] : memref<1x320xf32, #tpu.memory_space<vmem>>, vector<1x320xf32>
    %5 = vector.broadcast %4 : vector<1x320xf32> to vector<256x320xf32>
    %6 = arith.addf %3, %5 : vector<256x320xf32>
    %c0_5 = arith.constant 0 : index
    %c0_6 = arith.constant 0 : index
    %7 = vector.load %arg4[%c0_5, %c0_6] : memref<256x320xf32, #tpu.memory_space<vmem>>, vector<256x320xf32>
    tpu.vector_store %arg4[%c0_5, %c0_6], %6 {strides = array<i32>} : memref<256x320xf32, #tpu.memory_space<vmem>>, vector<256x320xf32>,
    return
  }
  func.func @transform_0(%arg0: i32) -> (i32, i32) {
    %c0_i32 = arith.constant 0 : i32
    %c0_i32_0 = arith.constant 0 : i32
    return %arg0, %c0_i32 : i32, i32
  }
  func.func @transform_1(%arg0: i32) -> (i32, i32) {
    %c0_i32 = arith.constant 0 : i32
    %c0_i32_0 = arith.constant 0 : i32
    %c0_i32_1 = arith.constant 0 : i32
    return %c0_i32, %c0_i32_0 : i32, i32
  }
  func.func @transform_2(%arg0: i32) -> (i32, i32) {
    %c0_i32 = arith.constant 0 : i32
    %c0_i32_0 = arith.constant 0 : i32
    %c0_i32_1 = arith.constant 0 : i32
    return %c0_i32, %c0_i32_0 : i32, i32
  }
  func.func @transform_3(%arg0: i32) -> (i32, i32) {
    %c0_i32 = arith.constant 0 : i32
    %c0_i32_0 = arith.constant 0 : i32
    return %arg0, %c0_i32 : i32, i32
  }
}

</mosaic_0001>

<llo_original>
// kernel: tpu_custom_call.1
$region0: #{tpu_custom_call.1}
  #allocation0 [shape = 'u32[]', space=smem, size = 0x4, offset = 0x4, fixed_abs, tag = 'smem constant byte address 0x4 - core index']
  #allocation1 [shape = 'u32[144,128]{1,0:T(1,128)}', space=vmem, size = 0x12000, scoped, tag = 'internal scratch']
  %s0 = inlined_call_operand.vmem [shape: f32[256,192], index: 0, kind: input, shape index: {}]
  %s1 = inlined_call_operand.vmem [shape: bf16[192,320], index: 1, kind: input, shape index: {}]
  %s2 = inlined_call_operand.vmem [shape: f32[1,320], index: 2, kind: input, shape index: {}]
  %s3 = inlined_call_operand.vmem [shape: f32[256,320], index: 3, kind: output, shape index: {}]
  %s4 = sld [smem:[#allocation0]]
  $region22: #{tpu_custom_call.1} parent=0
    _
  %s6 = ssub.s32 1, %s4
  %s7 = scalar_select 0, %s6, %s4
  // Predicated region
  $region2: #{tpu_custom_call.1} parent=0 // pred_check
    _
  $region3: #{tpu_custom_call.1} parent=0 // pred_check_branch
    %9 = sbr.rel (0) target = $region5
  $region4: #{tpu_custom_call.1} parent=0 // pred_region
    _
  $region5: #{tpu_custom_call.1} parent=0 // pred_fallthru
    _
  // Predicated region
  $region6: #{tpu_custom_call.1} parent=0 // pred_check
    _
  $region7: #{tpu_custom_call.1} parent=0 // pred_check_branch
    %11 = sbr.rel (0) target = $region9
  $region8: #{tpu_custom_call.1} parent=0 // pred_region
    _
  $region9: #{tpu_custom_call.1} parent=0 // pred_fallthru
    _
  // Predicated region
  $region10: #{tpu_custom_call.1} parent=0 // pred_check
    _
  $region11: #{tpu_custom_call.1} parent=0 // pred_check_branch
    %13 = sbr.rel (0) target = $region13
  $region12: #{tpu_custom_call.1} parent=0 // pred_region
    _
  $region13: #{tpu_custom_call.1} parent=0 // pred_fallthru
    _
  %v15 = vld [vmem:[%s0] sm:$0xff]
  %v16 = vld [vmem:[%s0 + $0x8] sm:$0xff]
  %v17 = vld [vmem:[%s0 + $0x10] sm:$0xff]
  %v18 = vld [vmem:[%s0 + $0x18] sm:$0xff]
  %v19 = vld [vmem:[%s0 + $0x20] sm:$0xff]
  %v20 = vld [vmem:[%s0 + $0x28] sm:$0xff]
  %v21 = vld [vmem:[%s0 + $0x30] sm:$0xff]
  %v22 = vld [vmem:[%s0 + $0x38] sm:$0xff]
  %v23 = vld [vmem:[%s0 + $0x40] sm:$0xff]
  %v24 = vld [vmem:[%s0 + $0x48] sm:$0xff]
  %v25 = vld [vmem:[%s0 + $0x50] sm:$0xff]
  %v26 = vld [vmem:[%s0 + $0x58] sm:$0xff]
  %v27 = vld [vmem:[%s0 + $0x60] sm:$0xff]
  %v28 = vld [vmem:[%s0 + $0x68] sm:$0xff]
  %v29 = vld [vmem:[%s0 + $0x70] sm:$0xff]
  %v30 = vld [vmem:[%s0 + $0x78] sm:$0xff]
  %v31 = vld [vmem:[%s0 + $0x80] sm:$0xff]
  %v32 = vld [vmem:[%s0 + $0x88] sm:$0xff]
  %v33 = vld [vmem:[%s0 + $0x90] sm:$0xff]
  %v34 = vld [vmem:[%s0 + $0x98] sm:$0xff]
  %v35 = vld [vmem:[%s0 + $0xa0] sm:$0xff]
  %v36 = vld [vmem:[%s0 + $0xa8] sm:$0xff]
  %v37 = vld [vmem:[%s0 + $0xb0] sm:$0xff]
  %v38 = vld [vmem:[%s0 + $0xb8] sm:$0xff]
  %v39 = vld [vmem:[%s0 + $0xc0] sm:$0xff]
  %v40 = vld [vmem:[%s0 + $0xc8] sm:$0xff]
  %v41 = vld [vmem:[%s0 + $0xd0] sm:$0xff]
  %v42 = vld [vmem:[%s0 + $0xd8] sm:$0xff]
  %v43 = vld [vmem:[%s0 + $0xe0] sm:$0xff]
  %v44 = vld [vmem:[%s0 + $0xe8] sm:$0xff]
  %v45 = vld [vmem:[%s0 + $0xf0] sm:$0xff]
  %v46 = vld [vmem:[%s0 + $0xf8] sm:$0xff]
  %v47 = vld [vmem:[%s0 + $0x100] sm:$0xff]
  %v48 = vld [vmem:[%s0 + $0x108] sm:$0xff]
  %v49 = vld [vmem:[%s0 + $0x110] sm:$0xff]
  %v50 = vld [vmem:[%s0 + $0x118] sm:$0xff]
  %v51 = vld [vmem:[%s0 + $0x120] sm:$0xff]
  %v52 = vld [vmem:[%s0 + $0x128] sm:$0xff]
  %v53 = vld [vmem:[%s0 + $0x130] sm:$0xff]
  %v54 = vld [vmem:[%s0 + $0x138] sm:$0xff]
  %v55 = vld [vmem:[%s0 + $0x140] sm:$0xff]
  %v56 = vld [vmem:[%s0 + $0x148] sm:$0xff]
  %v57 = vld [vmem:[%s0 + $0x150] sm:$0xff]
  %v58 = vld [vmem:[%s0 + $0x158] sm:$0xff]
  %v59 = vld [vmem:[%s0 + $0x160] sm:$0xff]
  %v60 = vld [vmem:[%s0 + $0x168] sm:$0xff]
  %v61 = vld [vmem:[%s0 + $0x170] sm:$0xff]
  %v62 = vld [vmem:[%s0 + $0x178] sm:$0xff]
  %v63 = vld [vmem:[%s0 + $0x180] sm:$0xff]
  %v64 = vld [vmem:[%s0 + $0x188] sm:$0xff]
  %v65 = vld [vmem:[%s0 + $0x190] sm:$0xff]
  %v66 = vld [vmem:[%s0 + $0x198] sm:$0xff]
  %v67 = vld [vmem:[%s0 + $0x1a0] sm:$0xff]
  %v68 = vld [vmem:[%s0 + $0x1a8] sm:$0xff]
  %v69 = vld [vmem:[%s0 + $0x1b0] sm:$0xff]
  %v70 = vld [vmem:[%s0 + $0x1b8] sm:$0xff]
  %v71 = vld [vmem:[%s0 + $0x1c0] sm:$0xff]
  %v72 = vld [vmem:[%s0 + $0x1c8] sm:$0xff]
  %v73 = vld [vmem:[%s0 + $0x1d0] sm:$0xff]
  %v74 = vld [vmem:[%s0 + $0x1d8] sm:$0xff]
  %v75 = vld [vmem:[%s0 + $0x1e0] sm:$0xff]
  %v76 = vld [vmem:[%s0 + $0x1e8] sm:$0xff]
  %v77 = vld [vmem:[%s0 + $0x1f0] sm:$0xff]
  %v78 = vld [vmem:[%s0 + $0x1f8] sm:$0xff]
  %v79 = vpack.c.bf16 %v17, %v15
  %v80 = vpack.c.bf16 %v18, %v16
  %v81 = vpack.c.bf16 %v21, %v19
  %v82 = vpack.c.bf16 %v22, %v20
  %v83 = vpack.c.bf16 %v25, %v23
  %v84 = vpack.c.bf16 %v26, %v24
  %v85 = vpack.c.bf16 %v29, %v27
  %v86 = vpack.c.bf16 %v30, %v28
  %v87 = vpack.c.bf16 %v33, %v31
  %v88 = vpack.c.bf16 %v34, %v32
  %v89 = vpack.c.bf16 %v37, %v35
  %v90 = vpack.c.bf16 %v38, %v36
  %v91 = vpack.c.bf16 %v41, %v39
  %v92 = vpack.c.bf16 %v42, %v40
  %v93 = vpack.c.bf16 %v45, %v43
  %v94 = vpack.c.bf16 %v46, %v44
  %v95 = vpack.c.bf16 %v49, %v47
  %v96 = vpack.c.bf16 %v50, %v48
  %v97 = vpack.c.bf16 %v53, %v51
  %v98 = vpack.c.bf16 %v54, %v52
  %v99 = vpack.c.bf16 %v57, %v55
  %v100 = vpack.c.bf16 %v58, %v56
  %v101 = vpack.c.bf16 %v61, %v59
  %v102 = vpack.c.bf16 %v62, %v60
  %v103 = vpack.c.bf16 %v65, %v63
  %v104 = vpack.c.bf16 %v66, %v64
  %v105 = vpack.c.bf16 %v69, %v67
  %v106 = vpack.c.bf16 %v70, %v68
  %v107 = vpack.c.bf16 %v73, %v71
  %v108 = vpack.c.bf16 %v74, %v72
  %v109 = vpack.c.bf16 %v77, %v75
  %v110 = vpack.c.bf16 %v78, %v76
  %v111 = vld [vmem:[%s1] sm:$0xff]
  %v112 = vld [vmem:[%s1 + $0x8] sm:$0xf]
  %v113 = vld [vmem:[%s1 + $0xc] sm:$0xff]
  %v114 = vld [vmem:[%s1 + $0x14] sm:$0xf]
  %v115 = vld [vmem:[%s1 + $0x18] sm:$0xff]
  %v116 = vld [vmem:[%s1 + $0x20] sm:$0xf]
  %v117 = vld [vmem:[%s1 + $0x24] sm:$0xff]
  %v118 = vld [vmem:[%s1 + $0x2c] sm:$0xf]
  %v119 = vld [vmem:[%s1 + $0x30] sm:$0xff]
  %v120 = vld [vmem:[%s1 + $0x38] sm:$0xf]
  %v121 = vld [vmem:[%s1 + $0x3c] sm:$0xff]
  %v122 = vld [vmem:[%s1 + $0x44] sm:$0xf]
  %v123 = vld [vmem:[%s1 + $0x48] sm:$0xff]
  %v124 = vld [vmem:[%s1 + $0x50] sm:$0xf]
  %v125 = vld [vmem:[%s1 + $0x54] sm:$0xff]
  %v126 = vld [vmem:[%s1 + $0x5c] sm:$0xf]
  %v127 = vld [vmem:[%s1 + $0x60] sm:$0xff]
  %v128 = vld [vmem:[%s1 + $0x68] sm:$0xf]
  %v129 = vld [vmem:[%s1 + $0x6c] sm:$0xff]
  %v130 = vld [vmem:[%s1 + $0x74] sm:$0xf]
  %v131 = vld [vmem:[%s1 + $0x78] sm:$0xff]
  %v132 = vld [vmem:[%s1 + $0x80] sm:$0xf]
  %v133 = vld [vmem:[%s1 + $0x84] sm:$0xff]
  %v134 = vld [vmem:[%s1 + $0x8c] sm:$0xf]
  %v135 = vld [vmem:[%s1 + $0x90] sm:$0xff]
  %v136 = vld [vmem:[%s1 + $0x98] sm:$0xf]
  %v137 = vld [vmem:[%s1 + $0x9c] sm:$0xff]
  %v138 = vld [vmem:[%s1 + $0xa4] sm:$0xf]
  %v139 = vld [vmem:[%s1 + $0xa8] sm:$0xff]
  %v140 = vld [vmem:[%s1 + $0xb0] sm:$0xf]
  %v141 = vld [vmem:[%s1 + $0xb4] sm:$0xff]
  %v142 = vld [vmem:[%s1 + $0xbc] sm:$0xf]
  %v143 = vld [vmem:[%s1 + $0xc0] sm:$0xff]
  %v144 = vld [vmem:[%s1 + $0xc8] sm:$0xf]
  %v145 = vld [vmem:[%s1 + $0xcc] sm:$0xff]
  %v146 = vld [vmem:[%s1 + $0xd4] sm:$0xf]
  %v147 = vld [vmem:[%s1 + $0xd8] sm:$0xff]
  %v148 = vld [vmem:[%s1 + $0xe0] sm:$0xf]
  %v149 = vld [vmem:[%s1 + $0xe4] sm:$0xff]
  %v150 = vld [vmem:[%s1 + $0xec] sm:$0xf]
  %v151 = vld [vmem:[%s1 + $0xf0] sm:$0xff]
  %v152 = vld [vmem:[%s1 + $0xf8] sm:$0xf]
  %v153 = vld [vmem:[%s1 + $0xfc] sm:$0xff]
  %v154 = vld [vmem:[%s1 + $0x104] sm:$0xf]
  %v155 = vld [vmem:[%s1 + $0x108] sm:$0xff]
  %v156 = vld [vmem:[%s1 + $0x110] sm:$0xf]
  %v157 = vld [vmem:[%s1 + $0x114] sm:$0xff]
  %v158 = vld [vmem:[%s1 + $0x11c] sm:$0xf]
  %v159 = vld [vmem:[%s2] sm:$0x7]
  %v161 = vlaneseq
  %v162 = vshrl.u32 %v161, 7
  %v163 = vsub.s32 0, %v162
  %v164 = vrot.slane %v159, %v163
  %v165 = vlaneseq
  %v166 = vshrl.u32 %v165, 7
  %v167 = vsub.s32 1, %v166
  %v168 = vrot.slane %v159, %v167
  %v169 = vlaneseq
  %v170 = vshrl.u32 %v169, 7
  %v171 = vsub.s32 2, %v170
  %v172 = vrot.slane %v159, %v171
  %v224 = vunpack.c.l.b16 %v111
  %v225 = vunpack.c.h.b16 %v111
  %v226 = vunpack.c.l.b16 %v112
  %v227 = vunpack.c.l.b16 %v113
  %v228 = vunpack.c.h.b16 %v113
  %v229 = vunpack.c.l.b16 %v114
  %v230 = vunpack.c.l.b16 %v115
  %v231 = vunpack.c.h.b16 %v115
  %v232 = vunpack.c.l.b16 %v116
  %v233 = vunpack.c.l.b16 %v117
  %v234 = vunpack.c.h.b16 %v117
  %v235 = vunpack.c.l.b16 %v118
  %v236 = vunpack.c.l.b16 %v119
  %v237 = vunpack.c.h.b16 %v119
  %v238 = vunpack.c.l.b16 %v120
  %v239 = vunpack.c.l.b16 %v121
  %v240 = vunpack.c.h.b16 %v121
  %v241 = vunpack.c.l.b16 %v122
  %v242 = vunpack.c.l.b16 %v123
  %v243 = vunpack.c.h.b16 %v123
  %v244 = vunpack.c.l.b16 %v124
  %v245 = vunpack.c.l.b16 %v125
  %v246 = vunpack.c.h.b16 %v125
  %v247 = vunpack.c.l.b16 %v126
  %v248 = vunpack.c.l.b16 %v127
  %v249 = vunpack.c.h.b16 %v127
  %v250 = vunpack.c.l.b16 %v128
  %v251 = vunpack.c.l.b16 %v129
  %v252 = vunpack.c.h.b16 %v129
  %v253 = vunpack.c.l.b16 %v130
  %v254 = vunpack.c.l.b16 %v131
  %v255 = vunpack.c.h.b16 %v131
  %v256 = vunpack.c.l.b16 %v132
  %v257 = vunpack.c.l.b16 %v133
  %v258 = vunpack.c.h.b16 %v133
  %v259 = vunpack.c.l.b16 %v134
  %v260 = vunpack.c.l.b16 %v135
  %v261 = vunpack.c.h.b16 %v135
  %v262 = vunpack.c.l.b16 %v136
  %v263 = vunpack.c.l.b16 %v137
  %v264 = vunpack.c.h.b16 %v137
  %v265 = vunpack.c.l.b16 %v138
  %v266 = vunpack.c.l.b16 %v139
  %v267 = vunpack.c.h.b16 %v139
  %v268 = vunpack.c.l.b16 %v140
  %v269 = vunpack.c.l.b16 %v141
  %v270 = vunpack.c.h.b16 %v141
  %v271 = vunpack.c.l.b16 %v142
  %v272 = vunpack.c.l.b16 %v143
  %v273 = vunpack.c.h.b16 %v143
  %v274 = vunpack.c.l.b16 %v144
  %v275 = vunpack.c.l.b16 %v145
  %v276 = vunpack.c.h.b16 %v145
  %v277 = vunpack.c.l.b16 %v146
  %v278 = vunpack.c.l.b16 %v147
  %v279 = vunpack.c.h.b16 %v147
  %v280 = vunpack.c.l.b16 %v148
  %v281 = vunpack.c.l.b16 %v149
  %v282 = vunpack.c.h.b16 %v149
  %v283 = vunpack.c.l.b16 %v150
  %v284 = vunpack.c.l.b16 %v151
  %v285 = vunpack.c.h.b16 %v151
  %v286 = vunpack.c.l.b16 %v152
  %v287 = vunpack.c.l.b16 %v153
  %v288 = vunpack.c.h.b16 %v153
  %v289 = vunpack.c.l.b16 %v154
  %v290 = vunpack.c.l.b16 %v155
  %v291 = vunpack.c.h.b16 %v155
  %v292 = vunpack.c.l.b16 %v156
  %v293 = vunpack.c.l.b16 %v157
  %v294 = vunpack.c.h.b16 %v157
  %v295 = vunpack.c.l.b16 %v158
  %v296 = vpack.c.b16 %v227, %v224
  %v297 = vpack.c.b16 %v228, %v225
  %v298 = vpack.c.b16 %v229, %v226
  %v299 = vpack.c.b16 %v233, %v230
  %v300 = vpack.c.b16 %v234, %v231
  %v301 = vpack.c.b16 %v235, %v232
  %v302 = vpack.c.b16 %v239, %v236
  %v303 = vpack.c.b16 %v240, %v237
  %v304 = vpack.c.b16 %v241, %v238
  %v305 = vpack.c.b16 %v245, %v242
  %v306 = vpack.c.b16 %v246, %v243
  %v307 = vpack.c.b16 %v247, %v244
  %v308 = vpack.c.b16 %v251, %v248
  %v309 = vpack.c.b16 %v252, %v249
  %v310 = vpack.c.b16 %v253, %v250
  %v311 = vpack.c.b16 %v257, %v254
  %v312 = vpack.c.b16 %v258, %v255
  %v313 = vpack.c.b16 %v259, %v256
  %v314 = vpack.c.b16 %v263, %v260
  %v315 = vpack.c.b16 %v264, %v261
  %v316 = vpack.c.b16 %v265, %v262
  %v317 = vpack.c.b16 %v269, %v266
  %v318 = vpack.c.b16 %v270, %v267
  %v319 = vpack.c.b16 %v271, %v268
  %v320 = vpack.c.b16 %v275, %v272
  %v321 = vpack.c.b16 %v276, %v273
  %v322 = vpack.c.b16 %v277, %v274
  %v323 = vpack.c.b16 %v281, %v278
  %v324 = vpack.c.b16 %v282, %v279
  %v325 = vpack.c.b16 %v283, %v280
  %v326 = vpack.c.b16 %v287, %v284
  %v327 = vpack.c.b16 %v288, %v285
  %v328 = vpack.c.b16 %v289, %v286
  %v329 = vpack.c.b16 %v293, %v290
  %v330 = vpack.c.b16 %v294, %v291
  %v331 = vpack.c.b16 %v295, %v292
  %vm368 = vcmask 523264
  %v370 = vsel %vm368, %v80, 0
  %v373 = vsel %vm368, %v82, 0
  %v376 = vsel %vm368, %v84, 0
  %v379 = vsel %vm368, %v86, 0
  %v382 = vsel %vm368, %v88, 0
  %v385 = vsel %vm368, %v90, 0
  %v388 = vsel %vm368, %v92, 0
  %v391 = vsel %vm368, %v94, 0
  %v394 = vsel %vm368, %v96, 0
  %v397 = vsel %vm368, %v98, 0
  %v400 = vsel %vm368, %v100, 0
  %v403 = vsel %vm368, %v102, 0
  %v406 = vsel %vm368, %v104, 0
  %v409 = vsel %vm368, %v106, 0
  %v412 = vsel %vm368, %v108, 0
  %v415 = vsel %vm368, %v110, 0
  %417 = vmatprep.subr.bf16.mxu0 %v318
  %418 = vmatpush1.bf16.msra.mxu0 %v317
  %419 = vmatprep.subr.bf16.mxu0 %v315
  %420 = vmatpush1.bf16.msra.mxu0 %v314
  %421 = vmatprep.subr.bf16.mxu0 %v312
  %422 = vmatpush1.bf16.msra.mxu0 %v311
  %423 = vmatprep.subr.bf16.mxu0 %v309
  %424 = vmatpush1.bf16.msra.mxu0 %v308
  %425 = vmatprep.subr.bf16.mxu0 %v306
  %426 = vmatpush1.bf16.msra.mxu0 %v305
  %427 = vmatprep.subr.bf16.mxu0 %v303
  %428 = vmatpush1.bf16.msra.mxu0 %v302
  %429 = vmatprep.subr.bf16.mxu0 %v300
  %430 = vmatpush1.bf16.msra.mxu0 %v299
  %431 = vmatprep.subr.bf16.mxu0 %v297
  %432 = vmatpush1.bf16.msra.mxu0 %v296
  %433 = vmatprep.subr.bf16.mxu0 0
  %434 = vmatpush2.bf16.msra.mxu0 0
  %435 = vmatprep.subr.bf16.mxu0 0
  %436 = vmatpush2.bf16.msra.mxu0 0
  %437 = vmatprep.subr.bf16.mxu0 0
  %438 = vmatpush2.bf16.msra.mxu0 0
  %439 = vmatprep.subr.bf16.mxu0 0
  %440 = vmatpush2.bf16.msra.mxu0 0
  %441 = vmatprep.subr.bf16.mxu0 %v330
  %442 = vmatpush2.bf16.msra.mxu0 %v329
  %443 = vmatprep.subr.bf16.mxu0 %v327
  %444 = vmatpush2.bf16.msra.mxu0 %v326
  %445 = vmatprep.subr.bf16.mxu0 %v324
  %446 = vmatpush2.bf16.msra.mxu0 %v323
  %447 = vmatprep.subr.bf16.mxu0 %v321
  %448 = vmatpush2.bf16.msra.mxu0 %v320
  %449 = vmatprep.mubr.bf16.mxu0 %v370
  %450 = vmatmul.mubr.bf16.gmra.mxu0 %v79
  %v451 = vpop.f32.mrf.mxu0
  %v452 = vadd.f32 %v164, %v451
  %v453 = vpop.f32.mrf.mxu0
  %v454 = vadd.f32 %v168, %v453
  %v455 = vpop.f32.mrf.mxu0
  %v456 = vadd.f32 %v164, %v455
  %v457 = vpop.f32.mrf.mxu0
  %v458 = vadd.f32 %v168, %v457
  %459 = vmatprep.mubr.bf16.mxu0 %v373
  %460 = vmatmul.mubr.bf16.gmra.mxu0 %v81
  %v461 = vpop.f32.mrf.mxu0
  %v462 = vadd.f32 %v164, %v461
  %v463 = vpop.f32.mrf.mxu0
  %v464 = vadd.f32 %v168, %v463
  %v465 = vpop.f32.mrf.mxu0
  %v466 = vadd.f32 %v164, %v465
  %v467 = vpop.f32.mrf.mxu0
  %v468 = vadd.f32 %v168, %v467
  %469 = vmatprep.mubr.bf16.mxu0 %v376
  %470 = vmatmul.mubr.bf16.gmra.mxu0 %v83
  %v471 = vpop.f32.mrf.mxu0
  %v472 = vadd.f32 %v164, %v471
  %v473 = vpop.f32.mrf.mxu0
  %v474 = vadd.f32 %v168, %v473
  %v475 = vpop.f32.mrf.mxu0
  %v476 = vadd.f32 %v164, %v475
  %v477 = vpop.f32.mrf.mxu0
  %v478 = vadd.f32 %v168, %v477
  %479 = vmatprep.mubr.bf16.mxu0 %v379
  %480 = vmatmul.mubr.bf16.gmra.mxu0 %v85
  %v481 = vpop.f32.mrf.mxu0
  %v482 = vadd.f32 %v164, %v481
  %v483 = vpop.f32.mrf.mxu0
  %v484 = vadd.f32 %v168, %v483
  %v485 = vpop.f32.mrf.mxu0
  %v486 = vadd.f32 %v164, %v485
  %v487 = vpop.f32.mrf.mxu0
  %v488 = vadd.f32 %v168, %v487
  %489 = vmatprep.mubr.bf16.mxu0 %v382
  %490 = vmatmul.mubr.bf16.gmra.mxu0 %v87
  %v491 = vpop.f32.mrf.mxu0
  %v492 = vadd.f32 %v164, %v491
  %v493 = vpop.f32.mrf.mxu0
  %v494 = vadd.f32 %v168, %v493
  %v495 = vpop.f32.mrf.mxu0
  %v496 = vadd.f32 %v164, %v495
  %v497 = vpop.f32.mrf.mxu0
  %v498 = vadd.f32 %v168, %v497
  %499 = vmatprep.mubr.bf16.mxu0 %v385
  %500 = vmatmul.mubr.bf16.gmra.mxu0 %v89
  %v501 = vpop.f32.mrf.mxu0
  %v502 = vadd.f32 %v164, %v501
  %v503 = vpop.f32.mrf.mxu0
  %v504 = vadd.f32 %v168, %v503
  %v505 = vpop.f32.mrf.mxu0
  %v506 = vadd.f32 %v164, %v505
  %v507 = vpop.f32.mrf.mxu0
  %v508 = vadd.f32 %v168, %v507
  %509 = vmatprep.mubr.bf16.mxu0 %v388
  %510 = vmatmul.mubr.bf16.gmra.mxu0 %v91
  %v511 = vpop.f32.mrf.mxu0
  %v512 = vadd.f32 %v164, %v511
  %v513 = vpop.f32.mrf.mxu0
  %v514 = vadd.f32 %v168, %v513
  %v515 = vpop.f32.mrf.mxu0
  %v516 = vadd.f32 %v164, %v515
  %v517 = vpop.f32.mrf.mxu0
  %v518 = vadd.f32 %v168, %v517
  %519 = vmatprep.mubr.bf16.mxu0 %v391
  %520 = vmatmul.mubr.bf16.gmra.mxu0 %v93
  %v521 = vpop.f32.mrf.mxu0
  %v522 = vadd.f32 %v164, %v521
  %v523 = vpop.f32.mrf.mxu0
  %v524 = vadd.f32 %v168, %v523
  %v525 = vpop.f32.mrf.mxu0
  %v526 = vadd.f32 %v164, %v525
  %v527 = vpop.f32.mrf.mxu0
  %v528 = vadd.f32 %v168, %v527
  %529 = vmatprep.mubr.bf16.mxu0 %v394
  %530 = vmatmul.mubr.bf16.gmra.mxu0 %v95
  %v531 = vpop.f32.mrf.mxu0
  %v532 = vadd.f32 %v164, %v531
  %v533 = vpop.f32.mrf.mxu0
  %v534 = vadd.f32 %v168, %v533
  %v535 = vpop.f32.mrf.mxu0
  %v536 = vadd.f32 %v164, %v535
  %v537 = vpop.f32.mrf.mxu0
  %v538 = vadd.f32 %v168, %v537
  %539 = vmatprep.mubr.bf16.mxu0 %v397
  %540 = vmatmul.mubr.bf16.gmra.mxu0 %v97
  %v541 = vpop.f32.mrf.mxu0
  %v542 = vadd.f32 %v164, %v541
  %v543 = vpop.f32.mrf.mxu0
  %v544 = vadd.f32 %v168, %v543
  %v545 = vpop.f32.mrf.mxu0
  %v546 = vadd.f32 %v164, %v545
  %v547 = vpop.f32.mrf.mxu0
  %v548 = vadd.f32 %v168, %v547
  %549 = vmatprep.mubr.bf16.mxu0 %v400
  %550 = vmatmul.mubr.bf16.gmra.mxu0 %v99
  %v551 = vpop.f32.mrf.mxu0
  %v552 = vadd.f32 %v164, %v551
  %v553 = vpop.f32.mrf.mxu0
  %v554 = vadd.f32 %v168, %v553
  %v555 = vpop.f32.mrf.mxu0
  %v556 = vadd.f32 %v164, %v555
  %v557 = vpop.f32.mrf.mxu0
  %v558 = vadd.f32 %v168, %v557
  %559 = vmatprep.mubr.bf16.mxu0 %v403
  %560 = vmatmul.mubr.bf16.gmra.mxu0 %v101
  %v561 = vpop.f32.mrf.mxu0
  %v562 = vadd.f32 %v164, %v561
  %v563 = vpop.f32.mrf.mxu0
  %v564 = vadd.f32 %v168, %v563
  %v565 = vpop.f32.mrf.mxu0
  %v566 = vadd.f32 %v164, %v565
  %v567 = vpop.f32.mrf.mxu0
  %v568 = vadd.f32 %v168, %v567
  %569 = vmatprep.mubr.bf16.mxu0 %v406
  %570 = vmatmul.mubr.bf16.gmra.mxu0 %v103
  %v571 = vpop.f32.mrf.mxu0
  %v572 = vadd.f32 %v164, %v571
  %v573 = vpop.f32.mrf.mxu0
  %v574 = vadd.f32 %v168, %v573
  %v575 = vpop.f32.mrf.mxu0
  %v576 = vadd.f32 %v164, %v575
  %v577 = vpop.f32.mrf.mxu0
  %v578 = vadd.f32 %v168, %v577
  %579 = vmatprep.mubr.bf16.mxu0 %v409
  %580 = vmatmul.mubr.bf16.gmra.mxu0 %v105
  %v581 = vpop.f32.mrf.mxu0
  %v582 = vadd.f32 %v164, %v581
  %v583 = vpop.f32.mrf.mxu0
  %v584 = vadd.f32 %v168, %v583
  %v585 = vpop.f32.mrf.mxu0
  %v586 = vadd.f32 %v164, %v585
  %v587 = vpop.f32.mrf.mxu0
  %v588 = vadd.f32 %v168, %v587
  %589 = vmatprep.mubr.bf16.mxu0 %v412
  %590 = vmatmul.mubr.bf16.gmra.mxu0 %v107
  %v591 = vpop.f32.mrf.mxu0
  %v592 = vadd.f32 %v164, %v591
  %v593 = vpop.f32.mrf.mxu0
  %v594 = vadd.f32 %v168, %v593
  %v595 = vpop.f32.mrf.mxu0
  %v596 = vadd.f32 %v164, %v595
  %v597 = vpop.f32.mrf.mxu0
  %v598 = vadd.f32 %v168, %v597
  %599 = vmatprep.mubr.bf16.mxu0 %v415
  %600 = vmatmul.mubr.bf16.gmra.mxu0 %v109
  %v601 = vpop.f32.mrf.mxu0
  %v602 = vadd.f32 %v164, %v601
  %v603 = vpop.f32.mrf.mxu0
  %v604 = vadd.f32 %v168, %v603
  %v605 = vpop.f32.mrf.mxu0
  %v606 = vadd.f32 %v164, %v605
  %v607 = vpop.f32.mrf.mxu0
  %v608 = vadd.f32 %v168, %v607
  %609 = vdwg.mxu0
  %610 = vmatprep.subr.bf16.mxu0 0
  %611 = vmatpush1.bf16.msra.mxu0 %v319
  %612 = vmatprep.subr.bf16.mxu0 0
  %613 = vmatpush1.bf16.msra.mxu0 %v316
  %614 = vmatprep.subr.bf16.mxu0 0
  %615 = vmatpush1.bf16.msra.mxu0 %v313
  %616 = vmatprep.subr.bf16.mxu0 0
  %617 = vmatpush1.bf16.msra.mxu0 %v310
  %618 = vmatprep.subr.bf16.mxu0 0
  %619 = vmatpush1.bf16.msra.mxu0 %v307
  %620 = vmatprep.subr.bf16.mxu0 0
  %621 = vmatpush1.bf16.msra.mxu0 %v304
  %622 = vmatprep.subr.bf16.mxu0 0
  %623 = vmatpush1.bf16.msra.mxu0 %v301
  %624 = vmatprep.subr.bf16.mxu0 0
  %625 = vmatpush1.bf16.msra.mxu0 %v298
  %626 = vmatprep.subr.bf16.mxu0 0
  %627 = vmatpush2.bf16.msra.mxu0 0
  %628 = vmatprep.subr.bf16.mxu0 0
  %629 = vmatpush2.bf16.msra.mxu0 0
  %630 = vmatprep.subr.bf16.mxu0 0
  %631 = vmatpush2.bf16.msra.mxu0 0
  %632 = vmatprep.subr.bf16.mxu0 0
  %633 = vmatpush2.bf16.msra.mxu0 0
  %634 = vmatprep.subr.bf16.mxu0 0
  %635 = vmatpush2.bf16.msra.mxu0 %v331
  %636 = vmatprep.subr.bf16.mxu0 0
  %637 = vmatpush2.bf16.msra.mxu0 %v328
  %638 = vmatprep.subr.bf16.mxu0 0
  %639 = vmatpush2.bf16.msra.mxu0 %v325
  %640 = vmatprep.subr.bf16.mxu0 0
  %641 = vmatpush2.bf16.msra.mxu0 %v322
  %642 = vmatprep.mubr.bf16.mxu0 %v370
  %643 = vmatmul.mubr.bf16.gmra.mxu0 %v79
  %v644 = vpop.f32.mrf.mxu0
  %v645 = vadd.f32 %v172, %v644
  %v646 = vpop.f32.mrf.mxu0
  %v647 = vpop.f32.mrf.mxu0
  %v648 = vadd.f32 %v172, %v647
  %v649 = vpop.f32.mrf.mxu0
  %650 = vmatprep.mubr.bf16.mxu0 %v373
  %651 = vmatmul.mubr.bf16.gmra.mxu0 %v81
  %v652 = vpop.f32.mrf.mxu0
  %v653 = vadd.f32 %v172, %v652
  %v654 = vpop.f32.mrf.mxu0
  %v655 = vpop.f32.mrf.mxu0
  %v656 = vadd.f32 %v172, %v655
  %v657 = vpop.f32.mrf.mxu0
  %658 = vmatprep.mubr.bf16.mxu0 %v376
  %659 = vmatmul.mubr.bf16.gmra.mxu0 %v83
  %v660 = vpop.f32.mrf.mxu0
  %v661 = vadd.f32 %v172, %v660
  %v662 = vpop.f32.mrf.mxu0
  %v663 = vpop.f32.mrf.mxu0
  %v664 = vadd.f32 %v172, %v663
  %v665 = vpop.f32.mrf.mxu0
  %666 = vmatprep.mubr.bf16.mxu0 %v379
  %667 = vmatmul.mubr.bf16.gmra.mxu0 %v85
  %v668 = vpop.f32.mrf.mxu0
  %v669 = vadd.f32 %v172, %v668
  %v670 = vpop.f32.mrf.mxu0
  %v671 = vpop.f32.mrf.mxu0
  %v672 = vadd.f32 %v172, %v671
  %v673 = vpop.f32.mrf.mxu0
  %674 = vmatprep.mubr.bf16.mxu0 %v382
  %675 = vmatmul.mubr.bf16.gmra.mxu0 %v87
  %v676 = vpop.f32.mrf.mxu0
  %v677 = vadd.f32 %v172, %v676
  %v678 = vpop.f32.mrf.mxu0
  %v679 = vpop.f32.mrf.mxu0
  %v680 = vadd.f32 %v172, %v679
  %v681 = vpop.f32.mrf.mxu0
  %682 = vmatprep.mubr.bf16.mxu0 %v385
  %683 = vmatmul.mubr.bf16.gmra.mxu0 %v89
  %v684 = vpop.f32.mrf.mxu0
  %v685 = vadd.f32 %v172, %v684
  %v686 = vpop.f32.mrf.mxu0
  %v687 = vpop.f32.mrf.mxu0
  %v688 = vadd.f32 %v172, %v687
  %v689 = vpop.f32.mrf.mxu0
  %690 = vmatprep.mubr.bf16.mxu0 %v388
  %691 = vmatmul.mubr.bf16.gmra.mxu0 %v91
  %v692 = vpop.f32.mrf.mxu0
  %v693 = vadd.f32 %v172, %v692
  %v694 = vpop.f32.mrf.mxu0
  %v695 = vpop.f32.mrf.mxu0
  %v696 = vadd.f32 %v172, %v695
  %v697 = vpop.f32.mrf.mxu0
  %698 = vmatprep.mubr.bf16.mxu0 %v391
  %699 = vmatmul.mubr.bf16.gmra.mxu0 %v93
  %v700 = vpop.f32.mrf.mxu0
  %v701 = vadd.f32 %v172, %v700
  %v702 = vpop.f32.mrf.mxu0
  %v703 = vpop.f32.mrf.mxu0
  %v704 = vadd.f32 %v172, %v703
  %v705 = vpop.f32.mrf.mxu0
  %706 = vmatprep.mubr.bf16.mxu0 %v394
  %707 = vmatmul.mubr.bf16.gmra.mxu0 %v95
  %v708 = vpop.f32.mrf.mxu0
  %v709 = vadd.f32 %v172, %v708
  %v710 = vpop.f32.mrf.mxu0
  %v711 = vpop.f32.mrf.mxu0
  %v712 = vadd.f32 %v172, %v711
  %v713 = vpop.f32.mrf.mxu0
  %714 = vmatprep.mubr.bf16.mxu0 %v397
  %715 = vmatmul.mubr.bf16.gmra.mxu0 %v97
  %v716 = vpop.f32.mrf.mxu0
  %v717 = vadd.f32 %v172, %v716
  %v718 = vpop.f32.mrf.mxu0
  %v719 = vpop.f32.mrf.mxu0
  %v720 = vadd.f32 %v172, %v719
  %v721 = vpop.f32.mrf.mxu0
  %722 = vmatprep.mubr.bf16.mxu0 %v400
  %723 = vmatmul.mubr.bf16.gmra.mxu0 %v99
  %v724 = vpop.f32.mrf.mxu0
  %v725 = vadd.f32 %v172, %v724
  %v726 = vpop.f32.mrf.mxu0
  %v727 = vpop.f32.mrf.mxu0
  %v728 = vadd.f32 %v172, %v727
  %v729 = vpop.f32.mrf.mxu0
  %730 = vmatprep.mubr.bf16.mxu0 %v403
  %731 = vmatmul.mubr.bf16.gmra.mxu0 %v101
  %v732 = vpop.f32.mrf.mxu0
  %v733 = vadd.f32 %v172, %v732
  %v734 = vpop.f32.mrf.mxu0
  %v735 = vpop.f32.mrf.mxu0
  %v736 = vadd.f32 %v172, %v735
  %v737 = vpop.f32.mrf.mxu0
  %738 = vmatprep.mubr.bf16.mxu0 %v406
  %739 = vmatmul.mubr.bf16.gmra.mxu0 %v103
  %v740 = vpop.f32.mrf.mxu0
  %v741 = vadd.f32 %v172, %v740
  %v742 = vpop.f32.mrf.mxu0
  %v743 = vpop.f32.mrf.mxu0
  %v744 = vadd.f32 %v172, %v743
  %v745 = vpop.f32.mrf.mxu0
  %746 = vmatprep.mubr.bf16.mxu0 %v409
  %747 = vmatmul.mubr.bf16.gmra.mxu0 %v105
  %v748 = vpop.f32.mrf.mxu0
  %v749 = vadd.f32 %v172, %v748
  %v750 = vpop.f32.mrf.mxu0
  %v751 = vpop.f32.mrf.mxu0
  %v752 = vadd.f32 %v172, %v751
  %v753 = vpop.f32.mrf.mxu0
  %754 = vmatprep.mubr.bf16.mxu0 %v412
  %755 = vmatmul.mubr.bf16.gmra.mxu0 %v107
  %v756 = vpop.f32.mrf.mxu0
  %v757 = vadd.f32 %v172, %v756
  %v758 = vpop.f32.mrf.mxu0
  %v759 = vpop.f32.mrf.mxu0
  %v760 = vadd.f32 %v172, %v759
  %v761 = vpop.f32.mrf.mxu0
  %762 = vmatprep.mubr.bf16.mxu0 %v415
  %763 = vmatmul.mubr.bf16.gmra.mxu0 %v109
  %v764 = vpop.f32.mrf.mxu0
  %v765 = vadd.f32 %v172, %v764
  %v766 = vpop.f32.mrf.mxu0
  %v767 = vpop.f32.mrf.mxu0
  %v768 = vadd.f32 %v172, %v767
  %v769 = vpop.f32.mrf.mxu0
  %770 = vdwg.mxu0
  %771 = vst [vmem:[%s3] sm:$0xff] %v452
  %772 = vst [vmem:[%s3 + $0x8] sm:$0xff] %v454
  %773 = vst.msk [vmem:[%s3 + $0x10] sm:$0xff] %vm368, %v645
  %774 = vst [vmem:[%s3 + $0x18] sm:$0xff] %v456
  %775 = vst [vmem:[%s3 + $0x20] sm:$0xff] %v458
  %776 = vst.msk [vmem:[%s3 + $0x28] sm:$0xff] %vm368, %v648
  %777 = vst [vmem:[%s3 + $0x30] sm:$0xff] %v462
  %778 = vst [vmem:[%s3 + $0x38] sm:$0xff] %v464
  %779 = vst.msk [vmem:[%s3 + $0x40] sm:$0xff] %vm368, %v653
  %780 = vst [vmem:[%s3 + $0x48] sm:$0xff] %v466
  %781 = vst [vmem:[%s3 + $0x50] sm:$0xff] %v468
  %782 = vst.msk [vmem:[%s3 + $0x58] sm:$0xff] %vm368, %v656
  %783 = vst [vmem:[%s3 + $0x60] sm:$0xff] %v472
  %784 = vst [vmem:[%s3 + $0x68] sm:$0xff] %v474
  %785 = vst.msk [vmem:[%s3 + $0x70] sm:$0xff] %vm368, %v661
  %786 = vst [vmem:[%s3 + $0x78] sm:$0xff] %v476
  %787 = vst [vmem:[%s3 + $0x80] sm:$0xff] %v478
  %788 = vst.msk [vmem:[%s3 + $0x88] sm:$0xff] %vm368, %v664
  %789 = vst [vmem:[%s3 + $0x90] sm:$0xff] %v482
  %790 = vst [vmem:[%s3 + $0x98] sm:$0xff] %v484
  %791 = vst.msk [vmem:[%s3 + $0xa0] sm:$0xff] %vm368, %v669
  %792 = vst [vmem:[%s3 + $0xa8] sm:$0xff] %v486
  %793 = vst [vmem:[%s3 + $0xb0] sm:$0xff] %v488
  %794 = vst.msk [vmem:[%s3 + $0xb8] sm:$0xff] %vm368, %v672
  %795 = vst [vmem:[%s3 + $0xc0] sm:$0xff] %v492
  %796 = vst [vmem:[%s3 + $0xc8] sm:$0xff] %v494
  %797 = vst.msk [vmem:[%s3 + $0xd0] sm:$0xff] %vm368, %v677
  %798 = vst [vmem:[%s3 + $0xd8] sm:$0xff] %v496
  %799 = vst [vmem:[%s3 + $0xe0] sm:$0xff] %v498
  %800 = vst.msk [vmem:[%s3 + $0xe8] sm:$0xff] %vm368, %v680
  %801 = vst [vmem:[%s3 + $0xf0] sm:$0xff] %v502
  %802 = vst [vmem:[%s3 + $0xf8] sm:$0xff] %v504
  %803 = vst.msk [vmem:[%s3 + $0x100] sm:$0xff] %vm368, %v685
  %804 = vst [vmem:[%s3 + $0x108] sm:$0xff] %v506
  %805 = vst [vmem:[%s3 + $0x110] sm:$0xff] %v508
  %806 = vst.msk [vmem:[%s3 + $0x118] sm:$0xff] %vm368, %v688
  %807 = vst [vmem:[%s3 + $0x120] sm:$0xff] %v512
  %808 = vst [vmem:[%s3 + $0x128] sm:$0xff] %v514
  %809 = vst.msk [vmem:[%s3 + $0x130] sm:$0xff] %vm368, %v693
  %810 = vst [vmem:[%s3 + $0x138] sm:$0xff] %v516
  %811 = vst [vmem:[%s3 + $0x140] sm:$0xff] %v518
  %812 = vst.msk [vmem:[%s3 + $0x148] sm:$0xff] %vm368, %v696
  %813 = vst [vmem:[%s3 + $0x150] sm:$0xff] %v522
  %814 = vst [vmem:[%s3 + $0x158] sm:$0xff] %v524
  %815 = vst.msk [vmem:[%s3 + $0x160] sm:$0xff] %vm368, %v701
  %816 = vst [vmem:[%s3 + $0x168] sm:$0xff] %v526
  %817 = vst [vmem:[%s3 + $0x170] sm:$0xff] %v528
  %818 = vst.msk [vmem:[%s3 + $0x178] sm:$0xff] %vm368, %v704
  %819 = vst [vmem:[%s3 + $0x180] sm:$0xff] %v532
  %820 = vst [vmem:[%s3 + $0x188] sm:$0xff] %v534
  %821 = vst.msk [vmem:[%s3 + $0x190] sm:$0xff] %vm368, %v709
  %822 = vst [vmem:[%s3 + $0x198] sm:$0xff] %v536
  %823 = vst [vmem:[%s3 + $0x1a0] sm:$0xff] %v538
  %824 = vst.msk [vmem:[%s3 + $0x1a8] sm:$0xff] %vm368, %v712
  %825 = vst [vmem:[%s3 + $0x1b0] sm:$0xff] %v542
  %826 = vst [vmem:[%s3 + $0x1b8] sm:$0xff] %v544
  %827 = vst.msk [vmem:[%s3 + $0x1c0] sm:$0xff] %vm368, %v717
  %828 = vst [vmem:[%s3 + $0x1c8] sm:$0xff] %v546
  %829 = vst [vmem:[%s3 + $0x1d0] sm:$0xff] %v548
  %830 = vst.msk [vmem:[%s3 + $0x1d8] sm:$0xff] %vm368, %v720
  %831 = vst [vmem:[%s3 + $0x1e0] sm:$0xff] %v552
  %832 = vst [vmem:[%s3 + $0x1e8] sm:$0xff] %v554
  %833 = vst.msk [vmem:[%s3 + $0x1f0] sm:$0xff] %vm368, %v725
  %834 = vst [vmem:[%s3 + $0x1f8] sm:$0xff] %v556
  %835 = vst [vmem:[%s3 + $0x200] sm:$0xff] %v558
  %836 = vst.msk [vmem:[%s3 + $0x208] sm:$0xff] %vm368, %v728
  %837 = vst [vmem:[%s3 + $0x210] sm:$0xff] %v562
  %838 = vst [vmem:[%s3 + $0x218] sm:$0xff] %v564
  %839 = vst.msk [vmem:[%s3 + $0x220] sm:$0xff] %vm368, %v733
  %840 = vst [vmem:[%s3 + $0x228] sm:$0xff] %v566
  %841 = vst [vmem:[%s3 + $0x230] sm:$0xff] %v568
  %842 = vst.msk [vmem:[%s3 + $0x238] sm:$0xff] %vm368, %v736
  %843 = vst [vmem:[%s3 + $0x240] sm:$0xff] %v572
  %844 = vst [vmem:[%s3 + $0x248] sm:$0xff] %v574
  %845 = vst.msk [vmem:[%s3 + $0x250] sm:$0xff] %vm368, %v741
  %846 = vst [vmem:[%s3 + $0x258] sm:$0xff] %v576
  %847 = vst [vmem:[%s3 + $0x260] sm:$0xff] %v578
  %848 = vst.msk [vmem:[%s3 + $0x268] sm:$0xff] %vm368, %v744
  %849 = vst [vmem:[%s3 + $0x270] sm:$0xff] %v582
  %850 = vst [vmem:[%s3 + $0x278] sm:$0xff] %v584
  %851 = vst.msk [vmem:[%s3 + $0x280] sm:$0xff] %vm368, %v749
  %852 = vst [vmem:[%s3 + $0x288] sm:$0xff] %v586
  %853 = vst [vmem:[%s3 + $0x290] sm:$0xff] %v588
  %854 = vst.msk [vmem:[%s3 + $0x298] sm:$0xff] %vm368, %v752
  %855 = vst [vmem:[%s3 + $0x2a0] sm:$0xff] %v592
  %856 = vst [vmem:[%s3 + $0x2a8] sm:$0xff] %v594
  %857 = vst.msk [vmem:[%s3 + $0x2b0] sm:$0xff] %vm368, %v757
  %858 = vst [vmem:[%s3 + $0x2b8] sm:$0xff] %v596
  %859 = vst [vmem:[%s3 + $0x2c0] sm:$0xff] %v598
  %860 = vst.msk [vmem:[%s3 + $0x2c8] sm:$0xff] %vm368, %v760
  %861 = vst [vmem:[%s3 + $0x2d0] sm:$0xff] %v602
  %862 = vst [vmem:[%s3 + $0x2d8] sm:$0xff] %v604
  %863 = vst.msk [vmem:[%s3 + $0x2e0] sm:$0xff] %vm368, %v765
  %864 = vst [vmem:[%s3 + $0x2e8] sm:$0xff] %v606
  %865 = vst [vmem:[%s3 + $0x2f0] sm:$0xff] %v608
  %866 = vst.msk [vmem:[%s3 + $0x2f8] sm:$0xff] %vm368, %v768
  // Predicated region
  $region14: #{tpu_custom_call.1} parent=0 // pred_check
    _
  $region15: #{tpu_custom_call.1} parent=0 // pred_check_branch
    %868 = sbr.rel (0) target = $region17
  $region16: #{tpu_custom_call.1} parent=0 // pred_region
    _
  $region17: #{tpu_custom_call.1} parent=0 // pred_fallthru
    _
  // Predicated region
  $region18: #{tpu_custom_call.1} parent=0 // pred_check
    _
  $region19: #{tpu_custom_call.1} parent=0 // pred_check_branch
    %870 = sbr.rel (0) target = $region21
  $region20: #{tpu_custom_call.1} parent=0 // pred_region
    _
  $region21: #{tpu_custom_call.1} parent=0 // pred_fallthru
    _

</llo_original>
